<compile_context>
chip_gen: v7x
topology: tpu7x:2x2x1
jax: 0.10.0
libtpu: 0.0.40
codegen_flags: <defaults>
</compile_context>

<pallas_src>
import jax
import jax.numpy as jnp
from jax.experimental import pallas as pl
from jax.experimental.pallas import tpu as pltpu

EPSILON = 1e-5
LANES = 128
SUBLANES = 8
NUM_CORES = 2                       # v7x: 2 TensorCores/chip; harmless on v5e/v6e.
MAX_BLOCK_BYTES = 2 * 1024 * 1024   # per-input, per-buffer block target (~2 MiB)
SMALL_ROWS = 512                    # <= 512x128 elements: single-step fast path
MIN_BLOCKS = 4                      # reduce path: aim for >= ~4 row blocks total


def _cdiv(a, b):
    return (a + b - 1) // b


def _round_up(x, m):
    return _cdiv(x, m) * m


def _make_single_block_kernel(eps):
    """Whole (rows, 128) slab in one grid step. No scratch, no pipeline."""

    def kernel(t_ref, l_ref, o_ref):
        logits = l_ref[...].astype(jnp.float32)
        targets = t_ref[...].astype(jnp.float32)
        hit = logits >= 0.5
        logits_bin = jnp.where(hit, 1.0, 0.0)
        inter = jnp.where(hit, targets, 0.0)               # == logits_bin * targets
        ti = jnp.sum(inter, keepdims=True)                 # (1, 1)
        td = jnp.sum(logits_bin + targets, keepdims=True)  # (1, 1)
        o_ref[...] = (2.0 * ti + eps) / (td + eps)

    return kernel


def _make_reduce_kernel(block_rows, total_rows, steps_per_core, full_blocks,
                        total_grid_blocks):
    """2-core grid reduction over (block_rows, 128) tiles, (8,128) accumulators."""
    always_full = (full_blocks == total_grid_blocks)  # static (trace-time)
    groups = block_rows // SUBLANES

    def kernel(t_ref, l_ref, o_inter_ref, o_denom_ref, inter_acc, denom_acc):
        core = pl.program_id(0)
        step = pl.program_id(1)
        blk = core * steps_per_core + step  # un-clamped logical row-block index

        @pl.when(step == 0)
        def _init():
            inter_acc[...] = jnp.zeros_like(inter_acc)
            denom_acc[...] = jnp.zeros_like(denom_acc)

        def accumulate(masked):
            logits = l_ref[...].astype(jnp.float32)
            targets = t_ref[...].astype(jnp.float32)
            hit = logits >= 0.5
            if masked:
                # This block overhangs the array (partial last block, or a
                # fully out-of-range step whose DMA index was clamped);
                # rows beyond `total_rows` hold unspecified data -> mask.
                row_ids = jax.lax.broadcasted_iota(
                    jnp.int32, (block_rows, LANES), 0)
                valid = (row_ids + blk * block_rows) < total_rows
                hit = jnp.logical_and(hit, valid)
                targets = jnp.where(valid, targets, 0.0)
            logits_bin = jnp.where(hit, 1.0, 0.0)
            inter = jnp.where(hit, targets, 0.0)  # == logits_bin * targets
            denom = logits_bin + targets
            # Fold (block_rows,128) -> (8,128): pure VPU vreg adds (no XLU),
            # and only one vreg read+write per accumulator per step.
            inter_acc[...] += jnp.sum(
                inter.reshape(groups, SUBLANES, LANES), axis=0)
            denom_acc[...] += jnp.sum(
                denom.reshape(groups, SUBLANES, LANES), axis=0)

        if always_full:
            accumulate(masked=False)
        else:
            @pl.when(blk < full_blocks)
            def _clean():
                accumulate(masked=False)

            @pl.when(blk >= full_blocks)
            def _tail():
                accumulate(masked=True)

        @pl.when(step == pl.num_programs(1) - 1)
        def _finalize():
            # Lane-dense per-core partials; cross-lane reduce + eps division
            # happen in the (tiny) JAX wrapper epilogue.
            o_inter_ref[...] = inter_acc[...].reshape(1, SUBLANES, LANES)
            o_denom_ref[...] = denom_acc[...].reshape(1, SUBLANES, LANES)

    return kernel


def dice_coefficient(targets, logits, epsilon=EPSILON, *,
                     block_rows=None, small_rows=SMALL_ROWS):
    """JAX/Pallas equivalent of dice_coefficient.forward. Returns shape (1,)."""
    eps = float(epsilon)  # static module parameter, baked in at trace time

    n = int(targets.size)
    assert int(logits.size) == n, "targets/logits must have the same size"

    # Flatten in native dtype (no wrapper upcast -> no extra HBM traffic).
    t_flat = jnp.reshape(targets, (-1,))
    l_flat = jnp.reshape(logits, (-1,))

    # Lane-align only (pad at most LANES-1 elements). Zero padding is safe:
    # padded logits (0.0) fall below the 0.5 threshold and padded targets are 0.
    if n % LANES != 0:
        pad = LANES - n % LANES
        t_flat = jnp.pad(t_flat, (0, pad))
        l_flat = jnp.pad(l_flat, (0, pad))

    rows = t_flat.shape[0] // LANES
    t2d = jnp.reshape(t_flat, (rows, LANES))
    l2d = jnp.reshape(l_flat, (rows, LANES))

    if rows <= small_rows and block_rows is None:
        # Small-input fast path: one grid step, block == full array dims.
        out = pl.pallas_call(
            _make_single_block_kernel(eps),
            out_shape=jax.ShapeDtypeStruct((1, 1), jnp.float32),
            grid_spec=pltpu.PrefetchScalarGridSpec(
                num_scalar_prefetch=0,
                grid=(1,),
                in_specs=[
                    pl.BlockSpec((rows, LANES), lambda i: (0, 0)),
                    pl.BlockSpec((rows, LANES), lambda i: (0, 0)),
                ],
                out_specs=pl.BlockSpec((1, 1), lambda i: (0, 0)),
            ),
            compiler_params=pltpu.CompilerParams(
                dimension_semantics=("arbitrary",),
            ),
        )(t2d, l2d)
        return jnp.reshape(out, (1,))

    # ---- Pipelined 2-core reduce path -------------------------------------
    if block_rows is None:
        itemsize = max(t2d.dtype.itemsize, l2d.dtype.itemsize)
        max_block_rows = max(
            SUBLANES, (MAX_BLOCK_BYTES // (LANES * itemsize)) // SUBLANES * SUBLANES)
        # At least ~MIN_BLOCKS row blocks so the pipeline actually overlaps.
        block_rows = min(max_block_rows, _round_up(_cdiv(rows, MIN_BLOCKS), SUBLANES))
    block_rows = min(block_rows, _round_up(rows, SUBLANES))
    assert block_rows > 0 and block_rows % SUBLANES == 0, \
        "block_rows must be sublane (8) aligned"

    total_blocks = _cdiv(rows, block_rows)         # real row blocks in the array
    steps_per_core = _cdiv(total_blocks, NUM_CORES)
    total_grid_blocks = NUM_CORES * steps_per_core  # >= total_blocks
    full_blocks = rows // block_rows               # blocks needing no tail mask
    last_block = total_blocks - 1

    if total_grid_blocks == total_blocks:
        # Even split: simple affine index map.
        def in_index_map(c, s):
            return (c * steps_per_core + s, 0)
    else:
        # Overhanging grid steps (at most NUM_CORES-1) clamp their DMA to the
        # last valid block; the kernel masks their contribution to zero.
        def in_index_map(c, s):
            return (jnp.minimum(c * steps_per_core + s, last_block), 0)

    out_spec = pl.BlockSpec((1, SUBLANES, LANES), lambda c, s: (c, 0, 0))

    inter_p, denom_p = pl.pallas_call(
        _make_reduce_kernel(block_rows, rows, steps_per_core, full_blocks,
                            total_grid_blocks),
        out_shape=(
            jax.ShapeDtypeStruct((NUM_CORES, SUBLANES, LANES), jnp.float32),
            jax.ShapeDtypeStruct((NUM_CORES, SUBLANES, LANES), jnp.float32),
        ),
        grid_spec=pltpu.PrefetchScalarGridSpec(
            num_scalar_prefetch=0,
            grid=(NUM_CORES, steps_per_core),
            in_specs=[
                pl.BlockSpec((block_rows, LANES), in_index_map),
                pl.BlockSpec((block_rows, LANES), in_index_map),
            ],
            out_specs=[out_spec, out_spec],
            scratch_shapes=[
                pltpu.VMEM((SUBLANES, LANES), jnp.float32),
                pltpu.VMEM((SUBLANES, LANES), jnp.float32),
            ],
        ),
        compiler_params=pltpu.CompilerParams(
            dimension_semantics=("parallel", "arbitrary"),
        ),
    )(t2d, l2d)

    # Tiny epilogue in XLA: combine per-core partials and apply epsilon.
    intersection = jnp.sum(inter_p)
    denominator = jnp.sum(denom_p)
    dice = (2.0 * intersection + eps) / (denominator + eps)
    return jnp.reshape(dice, (1,))  # matches PyTorch output shape (batch_size=1,)


def _reference(targets, logits, epsilon=EPSILON):
    logits_bin = jnp.where(logits.astype(jnp.float32) >= 0.5, 1.0, 0.0)
    t = jnp.reshape(targets.astype(jnp.float32), (1, -1))
    l = jnp.reshape(logits_bin, (1, -1))
    intersection = jnp.sum(l * t, axis=-1)
    return (2.0 * intersection + epsilon) / (jnp.sum(l + t, axis=-1) + epsilon)


if __name__ == "__main__":
    key = jax.random.PRNGKey(0)

    def check(shape, k, **kwargs):
        k1, k2 = jax.random.split(k)
        logits = jax.random.uniform(k1, shape, dtype=jnp.float32)            # probabilities
        targets = (jax.random.uniform(k2, shape) > 0.5).astype(jnp.float32)  # binary mask
        dice = dice_coefficient(targets, logits, **kwargs)
        jax.block_until_ready(dice)
        ref = _reference(targets, logits)
        assert dice.shape == (1,), (shape, dice.shape)
        assert jnp.allclose(dice, ref, rtol=1e-5, atol=1e-6), (shape, dice, ref)

    ks = jax.random.split(key, 5)
    # Primary small NCHW test (single-block fast path).
    check((2, 4, 16, 16), ks[0])
    # Non-lane-aligned element count (tiny tail pad to 128 lanes).
    check((1, 3, 7, 11), ks[1])
    # Forced 2-core reduce path, even block split, no masking.
    check((2, 4, 16, 16), ks[2], block_rows=8)
    # Forced reduce path with a partial last block AND an odd block count
    # (exercises the clamped, fully-masked overhang step on core 1).
    check((1, 4, 5, 128), ks[3], block_rows=8)
    # Natural reduce path (rows=576 > SMALL_ROWS, auto block sizing).
    check((1, 8, 96, 96), ks[4])

    print("KERNEL_OK")
</pallas_src>

<mosaic_0001>
module attributes {stable_mosaic.version = 11 : i64} {
  func.func @kernel(%arg0: i32, %arg1: memref<16x128xf32, #tpu.memory_space<vmem>>, %arg2: memref<16x128xf32, #tpu.memory_space<vmem>>, %arg3: memref<1x1xf32, #tpu.memory_space<vmem>>) attributes {dimension_semantics = [#tpu.dimension_semantics<arbitrary>], iteration_bounds = array<i64: 1>, scalar_prefetch = 0 : i64, scratch_operands = 0 : i64, tpu.core_type = #tpu.core_type<tc>, window_params = [{pipeline_mode = #tpu.pipeline_mode<synchronous>, transform_indices = @transform_0, window_bounds = array<i64: 16, 128>}, {pipeline_mode = #tpu.pipeline_mode<synchronous>, transform_indices = @transform_1, window_bounds = array<i64: 16, 128>}, {pipeline_mode = #tpu.pipeline_mode<synchronous>, transform_indices = @transform_2, window_bounds = array<i64: 1, 1>}]} {
    %c0 = arith.constant 0 : index
    %c0_0 = arith.constant 0 : index
    %0 = vector.load %arg2[%c0, %c0_0] : memref<16x128xf32, #tpu.memory_space<vmem>>, vector<16x128xf32>
    %c0_1 = arith.constant 0 : index
    %c0_2 = arith.constant 0 : index
    %1 = vector.load %arg1[%c0_1, %c0_2] : memref<16x128xf32, #tpu.memory_space<vmem>>, vector<16x128xf32>
    %cst = arith.constant 5.000000e-01 : f32
    %2 = vector.broadcast %cst : f32 to vector<16x128xf32>
    %3 = arith.cmpf oge, %0, %2 : vector<16x128xf32>
    %cst_3 = arith.constant 1.000000e+00 : f32
    %cst_4 = arith.constant 0.000000e+00 : f32
    %4 = vector.broadcast %cst_3 : f32 to vector<16x128xf32>
    %5 = vector.broadcast %cst_4 : f32 to vector<16x128xf32>
    %6 = arith.select %3, %4, %5 : vector<16x128xi1>, vector<16x128xf32>
    %cst_5 = arith.constant 0.000000e+00 : f32
    %7 = vector.broadcast %cst_5 : f32 to vector<16x128xf32>
    %8 = arith.select %3, %1, %7 : vector<16x128xi1>, vector<16x128xf32>
    %9 = vector.shape_cast %8 : vector<16x128xf32> to vector<1x16x128xf32>
    %cst_6 = arith.constant dense<0.000000e+00> : vector<1xf32>
    %10 = vector.multi_reduction <add>, %9, %cst_6 [1, 2] : vector<1x16x128xf32> to vector<1xf32>
    %11 = vector.shape_cast %10 : vector<1xf32> to vector<1x1x1xf32>
    %12 = vector.extract %11[0, 0, 0] : f32 from vector<1x1x1xf32>
    %13 = vector.broadcast %12 : f32 to vector<1x1xf32>
    %14 = arith.addf %6, %1 : vector<16x128xf32>
    %15 = vector.shape_cast %14 : vector<16x128xf32> to vector<1x16x128xf32>
    %cst_7 = arith.constant dense<0.000000e+00> : vector<1xf32>
    %16 = vector.multi_reduction <add>, %15, %cst_7 [1, 2] : vector<1x16x128xf32> to vector<1xf32>
    %17 = vector.shape_cast %16 : vector<1xf32> to vector<1x1x1xf32>
    %18 = vector.extract %17[0, 0, 0] : f32 from vector<1x1x1xf32>
    %19 = vector.broadcast %18 : f32 to vector<1x1xf32>
    %cst_8 = arith.constant 2.000000e+00 : f32
    %20 = vector.broadcast %cst_8 : f32 to vector<1x1xf32>
    %21 = arith.mulf %20, %13 : vector<1x1xf32>
    %cst_9 = arith.constant 9.99999974E-6 : f32
    %22 = vector.broadcast %cst_9 : f32 to vector<1x1xf32>
    %23 = arith.addf %21, %22 : vector<1x1xf32>
    %cst_10 = arith.constant 9.99999974E-6 : f32
    %24 = vector.broadcast %cst_10 : f32 to vector<1x1xf32>
    %25 = arith.addf %19, %24 : vector<1x1xf32>
    %26 = arith.divf %23, %25 : vector<1x1xf32>
    %c0_11 = arith.constant 0 : index
    %c0_12 = arith.constant 0 : index
    %27 = vector.load %arg3[%c0_11, %c0_12] : memref<1x1xf32, #tpu.memory_space<vmem>>, vector<1x1xf32>
    tpu.vector_store %arg3[%c0_11, %c0_12], %26 {strides = array<i32>} : memref<1x1xf32, #tpu.memory_space<vmem>>, vector<1x1xf32>,
    return
  }
  func.func @transform_0(%arg0: i32) -> (i32, i32) {
    %c0_i32 = arith.constant 0 : i32
    %c0_i32_0 = arith.constant 0 : i32
    %c0_i32_1 = arith.constant 0 : i32
    return %c0_i32, %c0_i32_0 : i32, i32
  }
  func.func @transform_1(%arg0: i32) -> (i32, i32) {
    %c0_i32 = arith.constant 0 : i32
    %c0_i32_0 = arith.constant 0 : i32
    %c0_i32_1 = arith.constant 0 : i32
    return %c0_i32, %c0_i32_0 : i32, i32
  }
  func.func @transform_2(%arg0: i32) -> (i32, i32) {
    %c0_i32 = arith.constant 0 : i32
    %c0_i32_0 = arith.constant 0 : i32
    %c0_i32_1 = arith.constant 0 : i32
    return %c0_i32, %c0_i32_0 : i32, i32
  }
}

</mosaic_0001>

<llo_original>
// kernel: tpu_custom_call.1
$region0: #{tpu_custom_call.1}
  #allocation0 [shape = 'u32[]', space=smem, size = 0x4, offset = 0x4, fixed_abs, tag = 'smem constant byte address 0x4 - core index']
  #allocation1 [shape = 'u32[144,128]{1,0:T(1,128)}', space=vmem, size = 0x12000, scoped, tag = 'internal scratch']
  %s0 = inlined_call_operand.hbm [shape: f32[16,128], index: 0, kind: input, shape index: {}]
  %s1 = inlined_call_operand.hbm [shape: f32[16,128], index: 1, kind: input, shape index: {}]
  %s2 = inlined_call_operand.hbm [shape: f32[1,1], index: 2, kind: output, shape index: {}]
  %s3 = sld [smem:[#allocation0]]
  $region26: #{tpu_custom_call.1} parent=0
    _
  %s5 = ssub.s32 1, %s3
  %s6 = scalar_select 0, %s5, %s3
  $region1: #{tpu_custom_call.1} parent=0
    #allocation2 [shape = 'u8[8192]{0}', space=vmem, size = 0x2000, scoped, tag = 'input window, operand 0, single buffered']
    #allocation3 [shape = 's32[1]{0}', space=sflag, size = 0x4, scoped, tag = 'scoped memory for tpu_custom_call.1']
    #allocation4 [shape = 's32[1]{0}', space=sflag, size = 0x4, scoped, tag = 'scoped memory for tpu_custom_call.1']
    #allocation5 [shape = 'u8[8192]{0}', space=vmem, size = 0x2000, scoped, tag = 'input window, operand 1, single buffered']
    #allocation6 [shape = 's32[1]{0}', space=sflag, size = 0x4, scoped, tag = 'scoped memory for tpu_custom_call.1']
    #allocation7 [shape = 'u8[512]{0}', space=vmem, size = 0x400, scoped, tag = 'output window, operand 0, single buffered']
    %7 = vsyncpa [#allocation3], 0
    %8 = vsyncpa [#allocation6], 0
    %9 = vsyncpa [#allocation4], 0
    // Predicated region
    $region2: #{tpu_custom_call.1} parent=1 // pred_check
      _
    $region3: #{tpu_custom_call.1} parent=1 // pred_check_branch
      %11 = sbr.rel (0) target = $region5
    $region4: #{tpu_custom_call.1} parent=1 // pred_region
      %s13 = ssub.s32 256, 256
      %14 = vsyncadd [#allocation3], %s13
      %s15 = sshll.u32 [#allocation2], 4
      %s16 = int_to_ptr.vmem [resolvable:$true] %s15
      %21 = dma.hbm_to_vmem [thread:$0]  %s0, 256, %s16, [#allocation3], 128, 128, 8
    $region5: #{tpu_custom_call.1} parent=1 // pred_fallthru
      _
    // Predicated region
    $region6: #{tpu_custom_call.1} parent=1 // pred_check
      _
    $region7: #{tpu_custom_call.1} parent=1 // pred_check_branch
      %23 = sbr.rel (0) target = $region9
    $region8: #{tpu_custom_call.1} parent=1 // pred_region
      %s25 = ssub.s32 256, 256
      %26 = vsyncadd [#allocation6], %s25
      %s27 = sshll.u32 [#allocation5], 4
      %s28 = int_to_ptr.vmem [resolvable:$true] %s27
      %33 = dma.hbm_to_vmem [thread:$0]  %s1, 256, %s28, [#allocation6], 128, 128, 8
    $region9: #{tpu_custom_call.1} parent=1 // pred_fallthru
      _
    // Predicated region
    $region10: #{tpu_custom_call.1} parent=1 // pred_check
      _
    $region11: #{tpu_custom_call.1} parent=1 // pred_check_branch
      %35 = sbr.rel (0) target = $region13
    $region12: #{tpu_custom_call.1} parent=1 // pred_region
      %36 = dma.done [#allocation3], 256
    $region13: #{tpu_custom_call.1} parent=1 // pred_fallthru
      _
    // Predicated region
    $region14: #{tpu_custom_call.1} parent=1 // pred_check
      _
    $region15: #{tpu_custom_call.1} parent=1 // pred_check_branch
      %38 = sbr.rel (0) target = $region17
    $region16: #{tpu_custom_call.1} parent=1 // pred_region
      %39 = dma.done [#allocation6], 256
    $region17: #{tpu_custom_call.1} parent=1 // pred_fallthru
      _
    %v40 = vld [vmem:[#allocation5] sm:$0xff]
    %v41 = vld [vmem:[#allocation5 + $0x8] sm:$0xff]
    %v42 = vld [vmem:[#allocation2] sm:$0xff]
    %v43 = vld [vmem:[#allocation2 + $0x8] sm:$0xff]
    %vm44 = vcmp.ge.f32.partialorder %v40, 0.5
    %vm45 = vcmp.ge.f32.partialorder %v41, 0.5
    %v46 = vsel %vm44, 1.0, 0.0
    %v47 = vsel %vm45, 1.0, 0.0
    %v48 = vsel %vm44, %v42, 0.0
    %v49 = vsel %vm45, %v43, 0.0
    %v50 = vadd.f32 %v48, %v49
    %51 = vadd.xlane.f32.xlu0 %v50
    %v52 = vpop.xlane.xlu0 %51
    %v53 = vrot.slane %v52, 4
    %v54 = vadd.f32 %v52, %v53
    %v55 = vrot.slane %v54, 2
    %v56 = vadd.f32 %v54, %v55
    %v57 = vrot.slane %v56, 1
    %v58 = vadd.f32 %v56, %v57
    %s59 = vtos %v58
    %v60 = vstv %s59
    %v61 = vadd.f32 %v46, %v42
    %v62 = vadd.f32 %v47, %v43
    %v63 = vadd.f32 %v61, %v62
    %64 = vadd.xlane.f32.xlu0 %v63
    %v65 = vpop.xlane.xlu0 %64
    %v66 = vrot.slane %v65, 4
    %v67 = vadd.f32 %v65, %v66
    %v68 = vrot.slane %v67, 2
    %v69 = vadd.f32 %v67, %v68
    %v70 = vrot.slane %v69, 1
    %v71 = vadd.f32 %v69, %v70
    %s72 = vtos %v71
    %v73 = vstv %s72
    %v74 = vmul.f32 %v60, 2.0
    %v75 = vadd.f32 %v74, 1e-05
    %v76 = vadd.f32 %v73, 1e-05
    %v77 = vrcp.pop %v76
    %v78 = vmul.f32 %v75, %v77
    %vm79 = vcmask 0
    %80 = vst.msk [vmem:[#allocation7] sm:$0x1] %vm79, %v78
    // Predicated region
    $region18: #{tpu_custom_call.1} parent=1 // pred_check
      _
    $region19: #{tpu_custom_call.1} parent=1 // pred_check_branch
      %82 = sbr.rel (0) target = $region21
    $region20: #{tpu_custom_call.1} parent=1 // pred_region
      %s84 = ssub.s32 16, 16
      %85 = vsyncadd [#allocation4], %s84
      %s87 = sshll.u32 [#allocation7], 4
      %s88 = int_to_ptr.vmem [resolvable:$true] %s87
      %90 = dma.vmem_to_hbm [thread:$0]  %s88, 16, %s2, [#allocation4]
    $region21: #{tpu_custom_call.1} parent=1 // pred_fallthru
      _
    // Predicated region
    $region22: #{tpu_custom_call.1} parent=1 // pred_check
      _
    $region23: #{tpu_custom_call.1} parent=1 // pred_check_branch
      %92 = sbr.rel (0) target = $region25
    $region24: #{tpu_custom_call.1} parent=1 // pred_region
      %93 = dma.done [#allocation4], 16
    $region25: #{tpu_custom_call.1} parent=1 // pred_fallthru
      _
    %94 = vsyncpa [#allocation3], 1
    %95 = vsyncpa [#allocation6], 1
    %96 = vsyncpa [#allocation4], 1

</llo_original>
